<compile_context>
chip_gen: v5e
topology: v5e:2x2
jax: 0.10.0
libtpu: 0.0.40
codegen_flags: <defaults>
</compile_context>

<pallas_src>
import jax
import jax.numpy as jnp
from jax.experimental import pallas as pl
from jax.experimental.pallas import tpu as pltpu

# ---- constants mirroring puzzle/fosae.py (BASE_SIZE chosen small for this synthetic run)
A = 1
LAYER_SIZE = 300
BASE_SIZE = 4
N_OBJ_FEATURE = (BASE_SIZE * 3) ** 2  # 144
P = 9
U = 9
BN_EPS = 1e-5


def predicate_kernel(temp_ref, gamma_ref, beta_ref, x_ref, w1_ref, b1_ref,
                     w2_ref, b2_ref, o_ref):
    u = pl.program_id(0)

    x = x_ref[...]                                              # (B, F) bf16

    # ---- fc1 (bf16 MXU, f32 accumulate)
    h1 = jnp.dot(x, w1_ref[...],
                 preferred_element_type=jnp.float32) + b1_ref[...]   # (B, L) f32

    # ---- BatchNorm1d(U), training-mode stats: this tile holds all (batch, feature)
    # elements of channel u, so the stats are exact in-tile reductions.
    n = jnp.float32(h1.shape[0] * h1.shape[1])
    row_sum = jnp.sum(h1, axis=1, keepdims=True)                # (B, 1)   lane reduce
    row_sumsq = jnp.sum(h1 * h1, axis=1, keepdims=True)         # (B, 1)
    total = jnp.sum(row_sum, axis=0, keepdims=True)             # (1, 1)   sublane reduce
    total_sq = jnp.sum(row_sumsq, axis=0, keepdims=True)        # (1, 1)
    mean = total / n
    var = jnp.maximum(total_sq / n - mean * mean, 0.0)          # biased var, clamped >= 0
    scale = gamma_ref[u] * jax.lax.rsqrt(var + BN_EPS)          # (1, 1)
    shift = beta_ref[u] - mean * scale                          # (1, 1)
    h = h1 * scale + shift                                      # (B, L)

    # TODO(synk): Dropout(0.4) and the Gumbel noise draw are stochastic; implemented
    # here as identity and a noiseless softmax(logits / temp), respectively.

    # ---- fc2, single fused matmul over the 2P output columns
    logits = jnp.dot(h.astype(jnp.bfloat16), w2_ref[...],
                     preferred_element_type=jnp.float32) + b2_ref[...]  # (B, 2P)

    # ---- softmax over the size-2 pair (column p vs column p+P) at temperature temp
    inv_t = 1.0 / temp_ref[0]
    za = logits[:, :P] * inv_t
    zb = logits[:, P:] * inv_t
    m = jnp.maximum(za, zb)
    ea = jnp.exp(za - m)
    eb = jnp.exp(zb - m)
    inv_den = pl.reciprocal(ea + eb, approx=True)
    o_ref[:, :P] = ea * inv_den
    o_ref[:, P:] = eb * inv_den


def init_params(key):
    f = A * N_OBJ_FEATURE
    k1, k2, k3, k4 = jax.random.split(key, 4)
    w1 = jax.random.normal(k1, (f, LAYER_SIZE), jnp.float32) * (1.0 / jnp.sqrt(f))
    b1 = jax.random.normal(k2, (1, LAYER_SIZE), jnp.float32) * 0.01
    gamma = jnp.ones((U,), jnp.float32)
    beta = jnp.zeros((U,), jnp.float32)
    # torch fc2 layout: column 2p -> logits[..., p, 0], column 2p+1 -> logits[..., p, 1].
    w2_il = jax.random.normal(k3, (LAYER_SIZE, P * 2), jnp.float32) * (1.0 / jnp.sqrt(LAYER_SIZE))
    b2_il = jax.random.normal(k4, (1, P * 2), jnp.float32) * 0.01
    # De-interleave once at init: first P columns = slot 0, last P columns = slot 1.
    w2 = jnp.concatenate([w2_il[:, 0::2], w2_il[:, 1::2]], axis=1)
    b2 = jnp.concatenate([b2_il[:, 0::2], b2_il[:, 1::2]], axis=1)
    return dict(
        w1=w1.astype(jnp.bfloat16), b1=b1,
        gamma=gamma, beta=beta,
        w2=w2.astype(jnp.bfloat16), b2=b2,
    )


def predicate_network(x, temp, params):
    """x: (B, U, A*N_OBJ_FEATURE) float32 -> prob: (B, U, P, 2) float32."""
    batch = x.shape[0]
    f = A * N_OBJ_FEATURE

    # u-major layout: grid step u sees all batch rows of object-slot u (exact BN stats).
    xu = jnp.transpose(x, (1, 0, 2)).astype(jnp.bfloat16)       # (U, B, F)
    temp_arr = jnp.asarray([temp], dtype=jnp.float32)

    smem = pl.BlockSpec(memory_space=pltpu.MemorySpace.SMEM)

    out = pl.pallas_call(
        predicate_kernel,
        grid=(U,),
        out_shape=jax.ShapeDtypeStruct((U, batch, 2 * P), jnp.float32),
        in_specs=[
            smem,                                                   # temp  (1,)
            smem,                                                   # gamma (U,)
            smem,                                                   # beta  (U,)
            pl.BlockSpec((None, batch, f), lambda u: (u, 0, 0)),    # x tile for slot u
            pl.BlockSpec((f, LAYER_SIZE), lambda u: (0, 0)),        # w1 (pinned)
            pl.BlockSpec((1, LAYER_SIZE), lambda u: (0, 0)),        # b1 (pinned)
            pl.BlockSpec((LAYER_SIZE, 2 * P), lambda u: (0, 0)),    # w2 (pinned, fused)
            pl.BlockSpec((1, 2 * P), lambda u: (0, 0)),             # b2 (pinned)
        ],
        out_specs=pl.BlockSpec((None, batch, 2 * P), lambda u: (u, 0, 0)),
        compiler_params=pltpu.CompilerParams(
            dimension_semantics=("parallel",),
            vmem_limit_bytes=32 * 1024 * 1024,
        ),
    )(temp_arr, params["gamma"], params["beta"], xu,
      params["w1"], params["b1"], params["w2"], params["b2"])

    # (U, B, 2P) -> (B, U, P, 2): first P lanes are pair-slot 0, last P are pair-slot 1.
    out = jnp.transpose(out, (1, 0, 2))
    prob = jnp.stack([out[..., :P], out[..., P:]], axis=-1)
    return prob


def reference_forward(x, temp, params):
    """Pure-JAX f32 reference (same de-interleaved fc2 layout as the kernel)."""
    w1 = params["w1"].astype(jnp.float32)
    w2 = params["w2"].astype(jnp.float32)
    h1 = jnp.einsum("buf,fl->bul", x, w1) + params["b1"]            # (B, U, L)
    mean = jnp.mean(h1, axis=(0, 2), keepdims=True)
    var = jnp.var(h1, axis=(0, 2), keepdims=True)                   # biased, as BN uses
    gamma = params["gamma"].reshape(1, U, 1)
    beta = params["beta"].reshape(1, U, 1)
    h = (h1 - mean) * jax.lax.rsqrt(var + BN_EPS) * gamma + beta
    logits = jnp.einsum("bul,lo->buo", h, w2) + params["b2"]        # (B, U, 2P)
    z = jnp.stack([logits[..., :P], logits[..., P:]], axis=-1) / temp
    return jax.nn.softmax(z, axis=-1)


if __name__ == "__main__":
    key = jax.random.PRNGKey(0)
    kx, kp = jax.random.split(key)
    B = 2
    x = jax.random.normal(kx, (B, U, A * N_OBJ_FEATURE), jnp.float32)
    params = init_params(kp)

    prob = predicate_network(x, temp=1.0, params=params)
    prob = jax.block_until_ready(prob)

    assert prob.shape == (B, U, P, 2), prob.shape
    # each (p) pair is a softmax -> sums to 1 (approx reciprocal -> loose tolerance)
    assert jnp.allclose(jnp.sum(prob, axis=-1), 1.0, atol=1e-2)
    # matches pure-JAX f32 reference within bf16-matmul tolerance
    ref = reference_forward(x, 1.0, params)
    assert jnp.allclose(prob, ref, atol=5e-2), float(jnp.max(jnp.abs(prob - ref)))
    print("KERNEL_OK")
</pallas_src>

<mosaic_0001>
module attributes {stable_mosaic.version = 11 : i64} {
  func.func @predicate_kernel(%arg0: i32, %arg1: memref<1xf32, #tpu.memory_space<smem>>, %arg2: memref<9xf32, #tpu.memory_space<smem>>, %arg3: memref<9xf32, #tpu.memory_space<smem>>, %arg4: memref<1x2x144xbf16, #tpu.memory_space<vmem>>, %arg5: memref<144x300xbf16, #tpu.memory_space<vmem>>, %arg6: memref<1x300xf32, #tpu.memory_space<vmem>>, %arg7: memref<300x18xbf16, #tpu.memory_space<vmem>>, %arg8: memref<1x18xf32, #tpu.memory_space<vmem>>, %arg9: memref<1x2x18xf32, #tpu.memory_space<vmem>>) attributes {dimension_semantics = [#tpu.dimension_semantics<parallel>], iteration_bounds = array<i64: 9>, scalar_prefetch = 0 : i64, scratch_operands = 0 : i64, tpu.core_type = #tpu.core_type<tc>, window_params = [{transform_indices = @transform_0, window_bounds = array<i64: 1>}, {transform_indices = @transform_1, window_bounds = array<i64: 9>}, {transform_indices = @transform_2, window_bounds = array<i64: 9>}, {transform_indices = @transform_3, window_bounds = array<i64: 1, 2, 144>}, {pipeline_mode = #tpu.pipeline_mode<synchronous>, transform_indices = @transform_4, window_bounds = array<i64: 144, 300>}, {pipeline_mode = #tpu.pipeline_mode<synchronous>, transform_indices = @transform_5, window_bounds = array<i64: 1, 300>}, {pipeline_mode = #tpu.pipeline_mode<synchronous>, transform_indices = @transform_6, window_bounds = array<i64: 300, 18>}, {pipeline_mode = #tpu.pipeline_mode<synchronous>, transform_indices = @transform_7, window_bounds = array<i64: 1, 18>}, {transform_indices = @transform_8, window_bounds = array<i64: 1, 2, 18>}]} {
    %c0 = arith.constant 0 : index
    %c0_0 = arith.constant 0 : index
    %c0_1 = arith.constant 0 : index
    %0 = vector.load %arg4[%c0, %c0_0, %c0_1] : memref<1x2x144xbf16, #tpu.memory_space<vmem>>, vector<1x2x144xbf16>
    %1 = vector.shape_cast %0 : vector<1x2x144xbf16> to vector<2x144xbf16>
    %c0_2 = arith.constant 0 : index
    %c0_3 = arith.constant 0 : index
    %2 = vector.load %arg5[%c0_2, %c0_3] : memref<144x300xbf16, #tpu.memory_space<vmem>>, vector<144x300xbf16>
    %cst = arith.constant dense<0.000000e+00> : vector<2x300xf32>
    %3 = tpu.matmul %1, %2, %cst {dimension_numbers = #tpu.dot_dimension_numbers<[1], [0], [0], [1], [0, 0, 1, 1], [], []>} : vector<2x144xbf16>, vector<144x300xbf16>, vector<2x300xf32> -> vector<2x300xf32>
    %c0_4 = arith.constant 0 : index
    %c0_5 = arith.constant 0 : index
    %4 = vector.load %arg6[%c0_4, %c0_5] : memref<1x300xf32, #tpu.memory_space<vmem>>, vector<1x300xf32>
    %5 = vector.broadcast %4 : vector<1x300xf32> to vector<2x300xf32>
    %6 = arith.addf %3, %5 : vector<2x300xf32>
    %cst_6 = arith.constant dense<0.000000e+00> : vector<2xf32>
    %7 = vector.multi_reduction <add>, %6, %cst_6 [1] : vector<2x300xf32> to vector<2xf32>
    %8 = vector.shape_cast %7 : vector<2xf32> to vector<2x1xf32>
    %9 = arith.mulf %6, %6 : vector<2x300xf32>
    %cst_7 = arith.constant dense<0.000000e+00> : vector<2xf32>
    %10 = vector.multi_reduction <add>, %9, %cst_7 [1] : vector<2x300xf32> to vector<2xf32>
    %11 = vector.shape_cast %10 : vector<2xf32> to vector<2x1xf32>
    %cst_8 = arith.constant dense<0.000000e+00> : vector<1xf32>
    %12 = vector.multi_reduction <add>, %8, %cst_8 [0] : vector<2x1xf32> to vector<1xf32>
    %13 = vector.shape_cast %12 : vector<1xf32> to vector<1x1xf32>
    %cst_9 = arith.constant dense<0.000000e+00> : vector<1xf32>
    %14 = vector.multi_reduction <add>, %11, %cst_9 [0] : vector<2x1xf32> to vector<1xf32>
    %15 = vector.shape_cast %14 : vector<1xf32> to vector<1x1xf32>
    %cst_10 = arith.constant 6.000000e+02 : f32
    %16 = vector.broadcast %cst_10 : f32 to vector<1x1xf32>
    %17 = arith.divf %13, %16 : vector<1x1xf32>
    %cst_11 = arith.constant 6.000000e+02 : f32
    %18 = vector.broadcast %cst_11 : f32 to vector<1x1xf32>
    %19 = arith.divf %15, %18 : vector<1x1xf32>
    %20 = arith.mulf %17, %17 : vector<1x1xf32>
    %21 = arith.subf %19, %20 : vector<1x1xf32>
    %cst_12 = arith.constant 0.000000e+00 : f32
    %22 = vector.broadcast %cst_12 : f32 to vector<1x1xf32>
    %23 = arith.maximumf %21, %22 : vector<1x1xf32>
    %24 = arith.index_cast %arg0 : i32 to index
    %25 = memref.load %arg2[%24] : memref<9xf32, #tpu.memory_space<smem>>
    %cst_13 = arith.constant 9.99999974E-6 : f32
    %26 = vector.broadcast %cst_13 : f32 to vector<1x1xf32>
    %27 = arith.addf %23, %26 : vector<1x1xf32>
    %28 = math.rsqrt %27 : vector<1x1xf32>
    %29 = vector.broadcast %25 : f32 to vector<1x1xf32>
    %30 = arith.mulf %29, %28 : vector<1x1xf32>
    %31 = arith.index_cast %arg0 : i32 to index
    %32 = memref.load %arg3[%31] : memref<9xf32, #tpu.memory_space<smem>>
    %33 = arith.mulf %17, %30 : vector<1x1xf32>
    %34 = vector.broadcast %32 : f32 to vector<1x1xf32>
    %35 = arith.subf %34, %33 : vector<1x1xf32>
    %36 = vector.broadcast %30 : vector<1x1xf32> to vector<2x300xf32>
    %37 = arith.mulf %6, %36 : vector<2x300xf32>
    %38 = vector.broadcast %35 : vector<1x1xf32> to vector<2x300xf32>
    %39 = arith.addf %37, %38 : vector<2x300xf32>
    %40 = arith.truncf %39 : vector<2x300xf32> to vector<2x300xbf16>
    %c0_14 = arith.constant 0 : index
    %c0_15 = arith.constant 0 : index
    %41 = vector.load %arg7[%c0_14, %c0_15] : memref<300x18xbf16, #tpu.memory_space<vmem>>, vector<300x18xbf16>
    %cst_16 = arith.constant dense<0.000000e+00> : vector<2x18xf32>
    %42 = tpu.matmul %40, %41, %cst_16 {dimension_numbers = #tpu.dot_dimension_numbers<[1], [0], [0], [1], [0, 0, 1, 1], [], []>} : vector<2x300xbf16>, vector<300x18xbf16>, vector<2x18xf32> -> vector<2x18xf32>
    %c0_17 = arith.constant 0 : index
    %c0_18 = arith.constant 0 : index
    %43 = vector.load %arg8[%c0_17, %c0_18] : memref<1x18xf32, #tpu.memory_space<vmem>>, vector<1x18xf32>
    %44 = vector.broadcast %43 : vector<1x18xf32> to vector<2x18xf32>
    %45 = arith.addf %42, %44 : vector<2x18xf32>
    %c0_19 = arith.constant 0 : index
    %46 = memref.load %arg1[%c0_19] : memref<1xf32, #tpu.memory_space<smem>>
    %cst_20 = arith.constant 1.000000e+00 : f32
    %47 = arith.divf %cst_20, %46 : f32
    %48 = vector.extract_strided_slice %45 {offsets = [0, 0], sizes = [2, 9], strides = [1, 1]} : vector<2x18xf32> to vector<2x9xf32>
    %49 = vector.broadcast %47 : f32 to vector<2x9xf32>
    %50 = arith.mulf %48, %49 : vector<2x9xf32>
    %51 = vector.extract_strided_slice %45 {offsets = [0, 9], sizes = [2, 9], strides = [1, 1]} : vector<2x18xf32> to vector<2x9xf32>
    %52 = vector.broadcast %47 : f32 to vector<2x9xf32>
    %53 = arith.mulf %51, %52 : vector<2x9xf32>
    %54 = arith.maximumf %50, %53 : vector<2x9xf32>
    %55 = arith.subf %50, %54 : vector<2x9xf32>
    %56 = math.exp %55 : vector<2x9xf32>
    %57 = arith.subf %53, %54 : vector<2x9xf32>
    %58 = math.exp %57 : vector<2x9xf32>
    %59 = arith.addf %56, %58 : vector<2x9xf32>
    %60 = tpu.reciprocal %59 {approx = true} : vector<2x9xf32> -> vector<2x9xf32>
    %61 = arith.mulf %56, %60 : vector<2x9xf32>
    %c0_21 = arith.constant 0 : index
    %c0_22 = arith.constant 0 : index
    %c0_23 = arith.constant 0 : index
    %62 = vector.load %arg9[%c0_21, %c0_22, %c0_23] : memref<1x2x18xf32, #tpu.memory_space<vmem>>, vector<1x2x9xf32>
    %63 = vector.shape_cast %62 : vector<1x2x9xf32> to vector<2x9xf32>
    %64 = vector.shape_cast %61 : vector<2x9xf32> to vector<1x2x9xf32>
    tpu.vector_store %arg9[%c0_21, %c0_22, %c0_23], %64 {strides = array<i32>} : memref<1x2x18xf32, #tpu.memory_space<vmem>>, vector<1x2x9xf32>,
    %65 = arith.mulf %58, %60 : vector<2x9xf32>
    %c0_24 = arith.constant 0 : index
    %c0_25 = arith.constant 0 : index
    %c9 = arith.constant 9 : index
    %66 = vector.load %arg9[%c0_24, %c0_25, %c9] : memref<1x2x18xf32, #tpu.memory_space<vmem>>, vector<1x2x9xf32>
    %67 = vector.shape_cast %66 : vector<1x2x9xf32> to vector<2x9xf32>
    %68 = vector.shape_cast %65 : vector<2x9xf32> to vector<1x2x9xf32>
    tpu.vector_store %arg9[%c0_24, %c0_25, %c9], %68 {strides = array<i32>} : memref<1x2x18xf32, #tpu.memory_space<vmem>>, vector<1x2x9xf32>,
    return
  }
  func.func @transform_0(%arg0: i32) -> i32 {
    %c0_i32 = arith.constant 0 : i32
    %c0_i32_0 = arith.constant 0 : i32
    return %c0_i32 : i32
  }
  func.func @transform_1(%arg0: i32) -> i32 {
    %c0_i32 = arith.constant 0 : i32
    %c0_i32_0 = arith.constant 0 : i32
    return %c0_i32 : i32
  }
  func.func @transform_2(%arg0: i32) -> i32 {
    %c0_i32 = arith.constant 0 : i32
    %c0_i32_0 = arith.constant 0 : i32
    return %c0_i32 : i32
  }
  func.func @transform_3(%arg0: i32) -> (i32, i32, i32) {
    %c0_i32 = arith.constant 0 : i32
    %c0_i32_0 = arith.constant 0 : i32
    %c0_i32_1 = arith.constant 0 : i32
    return %arg0, %c0_i32, %c0_i32_0 : i32, i32, i32
  }
  func.func @transform_4(%arg0: i32) -> (i32, i32) {
    %c0_i32 = arith.constant 0 : i32
    %c0_i32_0 = arith.constant 0 : i32
    %c0_i32_1 = arith.constant 0 : i32
    return %c0_i32, %c0_i32_0 : i32, i32
  }
  func.func @transform_5(%arg0: i32) -> (i32, i32) {
    %c0_i32 = arith.constant 0 : i32
    %c0_i32_0 = arith.constant 0 : i32
    %c0_i32_1 = arith.constant 0 : i32
    return %c0_i32, %c0_i32_0 : i32, i32
  }
  func.func @transform_6(%arg0: i32) -> (i32, i32) {
    %c0_i32 = arith.constant 0 : i32
    %c0_i32_0 = arith.constant 0 : i32
    %c0_i32_1 = arith.constant 0 : i32
    return %c0_i32, %c0_i32_0 : i32, i32
  }
  func.func @transform_7(%arg0: i32) -> (i32, i32) {
    %c0_i32 = arith.constant 0 : i32
    %c0_i32_0 = arith.constant 0 : i32
    %c0_i32_1 = arith.constant 0 : i32
    return %c0_i32, %c0_i32_0 : i32, i32
  }
  func.func @transform_8(%arg0: i32) -> (i32, i32, i32) {
    %c0_i32 = arith.constant 0 : i32
    %c0_i32_0 = arith.constant 0 : i32
    %c0_i32_1 = arith.constant 0 : i32
    return %arg0, %c0_i32, %c0_i32_0 : i32, i32, i32
  }
}

</mosaic_0001>

<llo_original>
// kernel: tpu_custom_call.1
$region0: #{tpu_custom_call.1}
  #allocation0 [shape = 'u32[]', space=smem, size = 0x4, offset = 0x4, fixed_abs, tag = 'smem constant byte address 0x4 - core index']
  #allocation1 [shape = 'u32[72,128]{1,0:T(1,128)}', space=vmem, size = 0x9000, scoped, tag = 'internal scratch']
  #allocation2 [shape = 'f32[1]{0:T(128)S(6)}', space=smem, size = 0x200, scoped, tag = 'scoped memory for tpu_custom_call.1']
  %s0 = inlined_call_operand.<no memory space> [shape: f32[1], index: 0, kind: input, shape index: {}]
  %s1 = inlined_call_operand.vmem [shape: f32[9], index: 1, kind: input, shape index: {}]
  %s2 = inlined_call_operand.vmem [shape: f32[9], index: 2, kind: input, shape index: {}]
  %s3 = inlined_call_operand.vmem [shape: bf16[9,2,144], index: 3, kind: input, shape index: {}]
  %s4 = inlined_call_operand.hbm [shape: bf16[144,300], index: 4, kind: input, shape index: {}]
  %s5 = inlined_call_operand.vmem [shape: f32[1,300], index: 5, kind: input, shape index: {}]
  %s6 = inlined_call_operand.vmem [shape: bf16[300,18], index: 6, kind: input, shape index: {}]
  %s7 = inlined_call_operand.vmem [shape: f32[1,18], index: 7, kind: input, shape index: {}]
  %s8 = inlined_call_operand.hbm [shape: f32[9,2,18], index: 8, kind: output, shape index: {}]
  %s9 = sld [smem:[#allocation0]]
  $region77: #{tpu_custom_call.1} parent=0
    _
  %s11 = ssub.s32 1, %s9
  %s12 = scalar_select 0, %s11, %s9
  %13 = sst [smem:[#allocation2]] %s0
  $region1: #{tpu_custom_call.1} parent=0
    #allocation3 [shape = 'u8[512]{0}', space=smem, size = 0x200, scoped, tag = 'input window, operand 1, single buffered']
    #allocation4 [shape = 's32[2]{0}', space=sflag, size = 0x8, scoped, tag = 'scoped memory for tpu_custom_call.1']
    #allocation5 [shape = 's32[2]{0}', space=sflag, size = 0x8, scoped, tag = 'scoped memory for tpu_custom_call.1']
    #allocation6 [shape = 's32[2]{0}', space=sflag, size = 0x8, scoped, tag = 'scoped memory for tpu_custom_call.1']
    #allocation7 [shape = 'u8[512]{0}', space=smem, size = 0x200, scoped, tag = 'input window, operand 2, single buffered']
    #allocation8 [shape = 's32[1]{0}', space=sflag, size = 0x4, scoped, tag = 'scoped memory for tpu_custom_call.1']
    #allocation9 [shape = 'u8[110592]{0}', space=vmem, size = 0x1b000, scoped, tag = 'input window, operand 4, single buffered']
    #allocation10 [shape = 'u8[2048]{0}', space=vmem, size = 0x800, scoped, tag = 'output window, operand 0']
    %14 = vsyncpa [#allocation6], 0
    %15 = vsyncpa [#allocation8], 0
    %16 = vsyncpa [#allocation4], 0
    %17 = vsyncpa [#allocation5], 0
    %s18 = scalar_lea.sflag [#allocation5], 1
    %19 = vsyncpa %s18, 0
    loop: start=0, step=1, limit=11
    $region2: #{tpu_custom_call.1} parent=1 // loop_pre_header
      _
    $region3: #{tpu_custom_call.1} parent=1 // loop_header
      %s21 = sphi 0, %s25
      %p22 = scmp.ge.s32.totalorder %s21, 11
      %s29 = sphi 0, %s29
      %s31 = sphi 0, %s29
      %s32 = sphi 0, %s31
      %s46 = sphi 0, %s32
      %s50 = sphi 0, %s50
      %s52 = sphi 0, %s50
      %s53 = sphi 0, %s52
      %s67 = sphi 0, %s53
      %s71 = sphi 0, %s71
      %s73 = sphi 0, %s71
      %s74 = sphi 0, %s73
      %s88 = sphi 0, %s74
      %s94 = sphi 0, %s96
      %s97 = sphi 0, %s94
      %s98 = sphi 0, %s97
      %s114 = sphi 0, %s98
      %s118 = sphi 0, %s118
      %s120 = sphi 0, %s118
      %s121 = sphi 0, %s120
      %s135 = sphi 0, %s121
      %s139 = sphi 0, %s139
      %s141 = sphi 0, %s139
      %s142 = sphi 0, %s141
      %s156 = sphi 0, %s142
      %s160 = sphi 0, %s160
      %s162 = sphi 0, %s160
      %s163 = sphi 0, %s162
      %s177 = sphi 0, %s163
      %s181 = sphi 0, %s181
      %s183 = sphi 0, %s181
      %s184 = sphi 0, %s183
      %s198 = sphi 0, %s184
      %s204 = sphi 0, %s206
      %s207 = sphi 0, %s204
      %s208 = sphi 0, %s207
      %s224 = sphi 0, %s208
    $region4: #{tpu_custom_call.1} parent=1 // loop_header_branch
      %24 = sbr.rel (%p22) target = $region8
    $region5: #{tpu_custom_call.1} parent=1 // loop_body
      %s26 = ssub.s32 %s21, 1
      %s27 = ssub.s32 %s21, 2
      %s28 = sadd.s32 %s21, 1
      %s30 = sadd.s32 %s29, 1
      %p33 = scmp.eq.s32.totalorder %s21, 8
      %p34 = scmp.ne.s32.totalorder %s29, %s31
      %p35 = scmp.eq.s32.totalorder %s21, 0
      %p36 = por %p34, %p35
      %p37 = scmp.ne.s32.totalorder %s29, %s31
      %p38 = scmp.eq.s32.totalorder %s26, 8
      %p39 = por %p37, %p38
      %p40 = scmp.ne.s32.totalorder %s31, %s32
      %p41 = scmp.eq.s32.totalorder %s26, 0
      %p42 = por %p40, %p41
      %p43 = scmp.ne.s32.totalorder %s31, %s32
      %p44 = scmp.eq.s32.totalorder %s27, 8
      %p45 = por %p43, %p44
      %p47 = scmp.ne.s32.totalorder %s32, %s46
      %p48 = scmp.eq.s32.totalorder %s27, 0
      %p49 = por %p47, %p48
      %s51 = sadd.s32 %s50, 1
      %p54 = scmp.eq.s32.totalorder %s21, 8
      %p55 = scmp.ne.s32.totalorder %s50, %s52
      %p56 = scmp.eq.s32.totalorder %s21, 0
      %p57 = por %p55, %p56
      %p58 = scmp.ne.s32.totalorder %s50, %s52
      %p59 = scmp.eq.s32.totalorder %s26, 8
      %p60 = por %p58, %p59
      %p61 = scmp.ne.s32.totalorder %s52, %s53
      %p62 = scmp.eq.s32.totalorder %s26, 0
      %p63 = por %p61, %p62
      %p64 = scmp.ne.s32.totalorder %s52, %s53
      %p65 = scmp.eq.s32.totalorder %s27, 8
      %p66 = por %p64, %p65
      %p68 = scmp.ne.s32.totalorder %s53, %s67
      %p69 = scmp.eq.s32.totalorder %s27, 0
      %p70 = por %p68, %p69
      %s72 = sadd.s32 %s71, 1
      %p75 = scmp.eq.s32.totalorder %s21, 8
      %p76 = scmp.ne.s32.totalorder %s71, %s73
      %p77 = scmp.eq.s32.totalorder %s21, 0
      %p78 = por %p76, %p77
      %p79 = scmp.ne.s32.totalorder %s71, %s73
      %p80 = scmp.eq.s32.totalorder %s26, 8
      %p81 = por %p79, %p80
      %p82 = scmp.ne.s32.totalorder %s73, %s74
      %p83 = scmp.eq.s32.totalorder %s26, 0
      %p84 = por %p82, %p83
      %p85 = scmp.ne.s32.totalorder %s73, %s74
      %p86 = scmp.eq.s32.totalorder %s27, 8
      %p87 = por %p85, %p86
      %p89 = scmp.ne.s32.totalorder %s74, %s88
      %p90 = scmp.eq.s32.totalorder %s27, 0
      %p91 = por %p89, %p90
      %s92 = ssub.s32 %s21, %s28
      %p93 = scmp.eq.s32.totalorder %s92, 0
      %s95 = sadd.s32 %s94, 1
      %s96 = scalar_select %p93, %s94, %s95
      %p99 = pneg %p93
      %p100 = scmp.eq.s32.totalorder %s21, 8
      %p101 = por %p99, %p100
      %p102 = scmp.ne.s32.totalorder %s94, %s97
      %p103 = scmp.eq.s32.totalorder %s21, 0
      %p104 = por %p102, %p103
      %p105 = scmp.ne.s32.totalorder %s94, %s97
      %p106 = scmp.eq.s32.totalorder %s26, 8
      %p107 = por %p105, %p106
      %p108 = scmp.ne.s32.totalorder %s97, %s98
      %p109 = scmp.eq.s32.totalorder %s26, 0
      %p110 = por %p108, %p109
      %p111 = scmp.ne.s32.totalorder %s97, %s98
      %p112 = scmp.eq.s32.totalorder %s27, 8
      %p113 = por %p111, %p112
      %p115 = scmp.ne.s32.totalorder %s98, %s114
      %p116 = scmp.eq.s32.totalorder %s27, 0
      %p117 = por %p115, %p116
      %s119 = sadd.s32 %s118, 1
      %p122 = scmp.eq.s32.totalorder %s21, 8
      %p123 = scmp.ne.s32.totalorder %s118, %s120
      %p124 = scmp.eq.s32.totalorder %s21, 0
      %p125 = por %p123, %p124
      %p126 = scmp.ne.s32.totalorder %s118, %s120
      %p127 = scmp.eq.s32.totalorder %s26, 8
      %p128 = por %p126, %p127
      %p129 = scmp.ne.s32.totalorder %s120, %s121
      %p130 = scmp.eq.s32.totalorder %s26, 0
      %p131 = por %p129, %p130
      %p132 = scmp.ne.s32.totalorder %s120, %s121
      %p133 = scmp.eq.s32.totalorder %s27, 8
      %p134 = por %p132, %p133
      %p136 = scmp.ne.s32.totalorder %s121, %s135
      %p137 = scmp.eq.s32.totalorder %s27, 0
      %p138 = por %p136, %p137
      %s140 = sadd.s32 %s139, 1
      %p143 = scmp.eq.s32.totalorder %s21, 8
      %p144 = scmp.ne.s32.totalorder %s139, %s141
      %p145 = scmp.eq.s32.totalorder %s21, 0
      %p146 = por %p144, %p145
      %p147 = scmp.ne.s32.totalorder %s139, %s141
      %p148 = scmp.eq.s32.totalorder %s26, 8
      %p149 = por %p147, %p148
      %p150 = scmp.ne.s32.totalorder %s141, %s142
      %p151 = scmp.eq.s32.totalorder %s26, 0
      %p152 = por %p150, %p151
      %p153 = scmp.ne.s32.totalorder %s141, %s142
      %p154 = scmp.eq.s32.totalorder %s27, 8
      %p155 = por %p153, %p154
      %p157 = scmp.ne.s32.totalorder %s142, %s156
      %p158 = scmp.eq.s32.totalorder %s27, 0
      %p159 = por %p157, %p158
      %s161 = sadd.s32 %s160, 1
      %p164 = scmp.eq.s32.totalorder %s21, 8
      %p165 = scmp.ne.s32.totalorder %s160, %s162
      %p166 = scmp.eq.s32.totalorder %s21, 0
      %p167 = por %p165, %p166
      %p168 = scmp.ne.s32.totalorder %s160, %s162
      %p169 = scmp.eq.s32.totalorder %s26, 8
      %p170 = por %p168, %p169
      %p171 = scmp.ne.s32.totalorder %s162, %s163
      %p172 = scmp.eq.s32.totalorder %s26, 0
      %p173 = por %p171, %p172
      %p174 = scmp.ne.s32.totalorder %s162, %s163
      %p175 = scmp.eq.s32.totalorder %s27, 8
      %p176 = por %p174, %p175
      %p178 = scmp.ne.s32.totalorder %s163, %s177
      %p179 = scmp.eq.s32.totalorder %s27, 0
      %p180 = por %p178, %p179
      %s182 = sadd.s32 %s181, 1
      %p185 = scmp.eq.s32.totalorder %s21, 8
      %p186 = scmp.ne.s32.totalorder %s181, %s183
      %p187 = scmp.eq.s32.totalorder %s21, 0
      %p188 = por %p186, %p187
      %p189 = scmp.ne.s32.totalorder %s181, %s183
      %p190 = scmp.eq.s32.totalorder %s26, 8
      %p191 = por %p189, %p190
      %p192 = scmp.ne.s32.totalorder %s183, %s184
      %p193 = scmp.eq.s32.totalorder %s26, 0
      %p194 = por %p192, %p193
      %p195 = scmp.ne.s32.totalorder %s183, %s184
      %p196 = scmp.eq.s32.totalorder %s27, 8
      %p197 = por %p195, %p196
      %p199 = scmp.ne.s32.totalorder %s184, %s198
      %p200 = scmp.eq.s32.totalorder %s27, 0
      %p201 = por %p199, %p200
      %s202 = ssub.s32 %s21, %s28
      %p203 = scmp.eq.s32.totalorder %s202, 0
      %s205 = sadd.s32 %s204, 1
      %s206 = scalar_select %p203, %s204, %s205
      %p209 = pneg %p203
      %p210 = scmp.eq.s32.totalorder %s21, 8
      %p211 = por %p209, %p210
      %p212 = scmp.ne.s32.totalorder %s204, %s207
      %p213 = scmp.eq.s32.totalorder %s21, 0
      %p214 = por %p212, %p213
      %p215 = scmp.ne.s32.totalorder %s204, %s207
      %p216 = scmp.eq.s32.totalorder %s26, 8
      %p217 = por %p215, %p216
      %p218 = scmp.ne.s32.totalorder %s207, %s208
      %p219 = scmp.eq.s32.totalorder %s26, 0
      %p220 = por %p218, %p219
      %p221 = scmp.ne.s32.totalorder %s207, %s208
      %p222 = scmp.eq.s32.totalorder %s27, 8
      %p223 = por %p221, %p222
      %p225 = scmp.ne.s32.totalorder %s208, %s224
      %p226 = scmp.eq.s32.totalorder %s27, 0
      %p227 = por %p225, %p226
      %p228 = scmp.le.s32.totalorder 1, %s21
      %p229 = scmp.lt.s32.totalorder %s21, 10
      %p230 = pnand %p228, %p229
      %p231 = pneg %p230
      // Predicated region
      $region9: #{tpu_custom_call.1} parent=5 // pred_check
        _
      $region10: #{tpu_custom_call.1} parent=5 // pred_check_branch
        %233 = sbr.rel (%p230) target = $region12
      $region11: #{tpu_custom_call.1} parent=5 // pred_region
        %s234 = ssub.s32 %s21, 1
        // Predicated region
        $region13: #{tpu_custom_call.1} parent=11 // pred_check
          %p235 = pneg %p42
        $region14: #{tpu_custom_call.1} parent=11 // pred_check_branch
          %237 = sbr.rel (%p235) target = $region16
        $region15: #{tpu_custom_call.1} parent=11 // pred_region
          _
        $region16: #{tpu_custom_call.1} parent=11 // pred_fallthru
          _
        // Predicated region
        $region17: #{tpu_custom_call.1} parent=11 // pred_check
          %p238 = pneg %p63
        $region18: #{tpu_custom_call.1} parent=11 // pred_check_branch
          %240 = sbr.rel (%p238) target = $region20
        $region19: #{tpu_custom_call.1} parent=11 // pred_region
          %242 = vsyncadd [#allocation6], 0
          %s244 = sshll.u32 %s1, 4
          %s245 = int_to_ptr.vmem [resolvable:$true] %s244
          %247 = dma.vmem_to_smem %s245, 16, [#allocation3], [#allocation6]
        $region20: #{tpu_custom_call.1} parent=11 // pred_fallthru
          _
        // Predicated region
        $region21: #{tpu_custom_call.1} parent=11 // pred_check
          %p248 = pneg %p84
        $region22: #{tpu_custom_call.1} parent=11 // pred_check_branch
          %250 = sbr.rel (%p248) target = $region24
        $region23: #{tpu_custom_call.1} parent=11 // pred_region
          %252 = vsyncadd [#allocation8], 0
          %s254 = sshll.u32 %s2, 4
          %s255 = int_to_ptr.vmem [resolvable:$true] %s254
          %257 = dma.vmem_to_smem %s255, 16, [#allocation7], [#allocation8]
        $region24: #{tpu_custom_call.1} parent=11 // pred_fallthru
          _
        // Predicated region
        $region25: #{tpu_custom_call.1} parent=11 // pred_check
          %p258 = pneg %p131
        $region26: #{tpu_custom_call.1} parent=11 // pred_check_branch
          %260 = sbr.rel (%p258) target = $region28
        $region27: #{tpu_custom_call.1} parent=11 // pred_region
          %262 = vsyncadd [#allocation4], 0
          %s263 = sshll.u32 %s4, 4
          %s264 = int_to_ptr.hbm [resolvable:$true] %s263
          %s265 = sshll.u32 [#allocation9], 4
          %s266 = int_to_ptr.vmem [resolvable:$true] %s265
          %271 = dma.hbm_to_vmem [thread:$0]  %s264, 3456, %s266, [#allocation4], 192, 192, 12
        $region28: #{tpu_custom_call.1} parent=11 // pred_fallthru
          _
        // Predicated region
        $region29: #{tpu_custom_call.1} parent=11 // pred_check
          %p272 = pneg %p152
        $region30: #{tpu_custom_call.1} parent=11 // pred_check_branch
          %274 = sbr.rel (%p272) target = $region32
        $region31: #{tpu_custom_call.1} parent=11 // pred_region
          _
        $region32: #{tpu_custom_call.1} parent=11 // pred_fallthru
          _
        // Predicated region
        $region33: #{tpu_custom_call.1} parent=11 // pred_check
          %p275 = pneg %p173
        $region34: #{tpu_custom_call.1} parent=11 // pred_check_branch
          %277 = sbr.rel (%p275) target = $region36
        $region35: #{tpu_custom_call.1} parent=11 // pred_region
          _
        $region36: #{tpu_custom_call.1} parent=11 // pred_fallthru
          _
        // Predicated region
        $region37: #{tpu_custom_call.1} parent=11 // pred_check
          %p278 = pneg %p194
        $region38: #{tpu_custom_call.1} parent=11 // pred_check_branch
          %280 = sbr.rel (%p278) target = $region40
        $region39: #{tpu_custom_call.1} parent=11 // pred_region
          _
        $region40: #{tpu_custom_call.1} parent=11 // pred_fallthru
          _
      $region12: #{tpu_custom_call.1} parent=5 // pred_fallthru
        _
      %p281 = scmp.lt.s32.totalorder %s21, 9
      // Predicated region
      $region41: #{tpu_custom_call.1} parent=5 // pred_check
        %p282 = pneg %p281
      $region42: #{tpu_custom_call.1} parent=5 // pred_check_branch
        %284 = sbr.rel (%p282) target = $region44
      $region43: #{tpu_custom_call.1} parent=5 // pred_region
        // Predicated region
        $region45: #{tpu_custom_call.1} parent=43 // pred_check
          %p285 = pneg %p104
        $region46: #{tpu_custom_call.1} parent=43 // pred_check_branch
          %287 = sbr.rel (%p285) target = $region48
        $region47: #{tpu_custom_call.1} parent=43 // pred_region
          %p288 = scmp.lt.s32.totalorder %s21, 8
          %s289 = scalar_select %p288, %s21, 8
          %s290 = smul.addr %s289, 2
          %s291 = scalar_lea.vmem %s3, %s290
        $region48: #{tpu_custom_call.1} parent=43 // pred_fallthru
          _
      $region44: #{tpu_custom_call.1} parent=5 // pred_fallthru
        _
      %p292 = scmp.le.s32.totalorder 1, %s21
      %p293 = scmp.lt.s32.totalorder %s21, 10
      %p294 = pnand %p292, %p293
      %p295 = pneg %p294
      // Predicated region
      $region49: #{tpu_custom_call.1} parent=5 // pred_check
        _
      $region50: #{tpu_custom_call.1} parent=5 // pred_check_branch
        %297 = sbr.rel (%p294) target = $region52
      $region51: #{tpu_custom_call.1} parent=5 // pred_region
        %s298 = ssub.s32 %s21, 1
        // Predicated region
        $region53: #{tpu_custom_call.1} parent=51 // pred_check
          %p299 = pneg %p63
        $region54: #{tpu_custom_call.1} parent=51 // pred_check_branch
          %301 = sbr.rel (%p299) target = $region56
        $region55: #{tpu_custom_call.1} parent=51 // pred_region
          %303 = dma.done [#allocation6], 16
        $region56: #{tpu_custom_call.1} parent=51 // pred_fallthru
          _
        // Predicated region
        $region57: #{tpu_custom_call.1} parent=51 // pred_check
          %p304 = pneg %p84
        $region58: #{tpu_custom_call.1} parent=51 // pred_check_branch
          %306 = sbr.rel (%p304) target = $region60
        $region59: #{tpu_custom_call.1} parent=51 // pred_region
          %308 = dma.done [#allocation8], 16
        $region60: #{tpu_custom_call.1} parent=51 // pred_fallthru
          _
        // Predicated region
        $region61: #{tpu_custom_call.1} parent=51 // pred_check
          %p309 = pneg %p131
        $region62: #{tpu_custom_call.1} parent=51 // pred_check_branch
          %311 = sbr.rel (%p309) target = $region64
        $region63: #{tpu_custom_call.1} parent=51 // pred_region
          %313 = dma.done [#allocation4], 3456
        $region64: #{tpu_custom_call.1} parent=51 // pred_fallthru
          _
        %314 = sfence
        %p315 = pneg %p42
        %p316 = pneg %p39
        %p317 = pneg %p63
        %p318 = pneg %p60
        %p319 = pneg %p84
        %p320 = pneg %p81
        %p321 = scmp.lt.s32.totalorder %s26, 8
        %s322 = scalar_select %p321, %s26, 8
        %s323 = smul.addr %s322, 2
        %s324 = scalar_lea.vmem %s3, %s323
        %p325 = pneg %p110
        %p326 = pneg %p107
        %p327 = pneg %p131
        %p328 = pneg %p128
        %p329 = pneg %p152
        %p330 = pneg %p149
        %p331 = pneg %p173
        %p332 = pneg %p170
        %p333 = pneg %p194
        %p334 = pneg %p191
        %p335 = pneg %p220
        %p336 = pneg %p217
        %s337 = sand.u32 %s207, 1
        %s338 = scalar_lea.sflag [#allocation5], %s337
        %s339 = sand.u32 %s207, 1
        %s340 = smul.addr %s339, 2
        %s341 = scalar_lea.vmem [#allocation10], %s340
        %p342 = scmp.lt.s32.totalorder %s26, 8
        %s343 = scalar_select %p342, %s26, 8
        %s344 = smul.addr %s343, 2
        %s345 = scalar_lea.vmem %s3, %s344
        %v347 = vld [vmem:[%s345] sm:$0x3]
        %v348 = vld [vmem:[#allocation9] sm:$0xff]
        %v349 = vld [vmem:[#allocation9 + $0x8] sm:$0xf]
        %v350 = vld [vmem:[#allocation9 + $0xc] sm:$0xff]
        %v351 = vld [vmem:[#allocation9 + $0x14] sm:$0xf]
        %v352 = vld [vmem:[#allocation9 + $0x18] sm:$0xff]
        %v353 = vld [vmem:[#allocation9 + $0x20] sm:$0xf]
        %v354 = vld [vmem:[#allocation9 + $0x24] sm:$0xff]
        %v355 = vld [vmem:[#allocation9 + $0x2c] sm:$0xf]
        %v356 = vld [vmem:[#allocation9 + $0x30] sm:$0xff]
        %v357 = vld [vmem:[#allocation9 + $0x38] sm:$0xf]
        %v358 = vld [vmem:[#allocation9 + $0x3c] sm:$0xff]
        %v359 = vld [vmem:[#allocation9 + $0x44] sm:$0xf]
        %v360 = vld [vmem:[#allocation9 + $0x48] sm:$0xff]
        %v361 = vld [vmem:[#allocation9 + $0x50] sm:$0xf]
        %v362 = vld [vmem:[#allocation9 + $0x54] sm:$0xff]
        %v363 = vld [vmem:[#allocation9 + $0x5c] sm:$0xf]
        %v364 = vld [vmem:[#allocation9 + $0x60] sm:$0xff]
        %v365 = vld [vmem:[#allocation9 + $0x68] sm:$0xf]
        %v366 = vld [vmem:[#allocation9 + $0x6c] sm:$0xff]
        %v367 = vld [vmem:[#allocation9 + $0x74] sm:$0xf]
        %v368 = vld [vmem:[#allocation9 + $0x78] sm:$0xff]
        %v369 = vld [vmem:[#allocation9 + $0x80] sm:$0xf]
        %v370 = vld [vmem:[#allocation9 + $0x84] sm:$0xff]
        %v371 = vld [vmem:[#allocation9 + $0x8c] sm:$0xf]
        %v372 = vld [vmem:[#allocation9 + $0x90] sm:$0xff]
        %v373 = vld [vmem:[#allocation9 + $0x98] sm:$0xf]
        %v374 = vld [vmem:[#allocation9 + $0x9c] sm:$0xff]
        %v375 = vld [vmem:[#allocation9 + $0xa4] sm:$0xf]
        %v376 = vld [vmem:[#allocation9 + $0xa8] sm:$0xff]
        %v377 = vld [vmem:[#allocation9 + $0xb0] sm:$0xf]
        %v378 = vld [vmem:[#allocation9 + $0xb4] sm:$0xff]
        %v379 = vld [vmem:[#allocation9 + $0xbc] sm:$0xf]
        %v380 = vld [vmem:[#allocation9 + $0xc0] sm:$0xff]
        %v381 = vld [vmem:[#allocation9 + $0xc8] sm:$0xf]
        %v382 = vld [vmem:[#allocation9 + $0xcc] sm:$0xff]
        %v383 = vld [vmem:[#allocation9 + $0xd4] sm:$0xf]
        %v384 = vld [vmem:[%s5] sm:$0x7]
        %v386 = vperm.slane %v384, 0
        %v387 = vperm.slane %v384, 1
        %v388 = vperm.slane %v384, 2
        %393 = vst [vmem:[#allocation1] ss:$9 sm:$0xff] %v347
        %v394 = vld [vmem:[#allocation1] sm:$0xff]
        %v395 = vld [vmem:[#allocation1 + $0x9] sm:$0xff]
        %v433 = vunpack.c.l.b16 %v348
        %v434 = vunpack.c.h.b16 %v348
        %v435 = vunpack.c.l.b16 %v349
        %v436 = vunpack.c.l.b16 %v350
        %v437 = vunpack.c.h.b16 %v350
        %v438 = vunpack.c.l.b16 %v351
        %v439 = vunpack.c.l.b16 %v352
        %v440 = vunpack.c.h.b16 %v352
        %v441 = vunpack.c.l.b16 %v353
        %v442 = vunpack.c.l.b16 %v354
        %v443 = vunpack.c.h.b16 %v354
        %v444 = vunpack.c.l.b16 %v355
        %v445 = vunpack.c.l.b16 %v356
        %v446 = vunpack.c.h.b16 %v356
        %v447 = vunpack.c.l.b16 %v357
        %v448 = vunpack.c.l.b16 %v358
        %v449 = vunpack.c.h.b16 %v358
        %v450 = vunpack.c.l.b16 %v359
        %v451 = vunpack.c.l.b16 %v360
        %v452 = vunpack.c.h.b16 %v360
        %v453 = vunpack.c.l.b16 %v361
        %v454 = vunpack.c.l.b16 %v362
        %v455 = vunpack.c.h.b16 %v362
        %v456 = vunpack.c.l.b16 %v363
        %v457 = vunpack.c.l.b16 %v364
        %v458 = vunpack.c.h.b16 %v364
        %v459 = vunpack.c.l.b16 %v365
        %v460 = vunpack.c.l.b16 %v366
        %v461 = vunpack.c.h.b16 %v366
        %v462 = vunpack.c.l.b16 %v367
        %v463 = vunpack.c.l.b16 %v368
        %v464 = vunpack.c.h.b16 %v368
        %v465 = vunpack.c.l.b16 %v369
        %v466 = vunpack.c.l.b16 %v370
        %v467 = vunpack.c.h.b16 %v370
        %v468 = vunpack.c.l.b16 %v371
        %v469 = vunpack.c.l.b16 %v372
        %v470 = vunpack.c.h.b16 %v372
        %v471 = vunpack.c.l.b16 %v373
        %v472 = vunpack.c.l.b16 %v374
        %v473 = vunpack.c.h.b16 %v374
        %v474 = vunpack.c.l.b16 %v375
        %v475 = vunpack.c.l.b16 %v376
        %v476 = vunpack.c.h.b16 %v376
        %v477 = vunpack.c.l.b16 %v377
        %v478 = vunpack.c.l.b16 %v378
        %v479 = vunpack.c.h.b16 %v378
        %v480 = vunpack.c.l.b16 %v379
        %v481 = vunpack.c.l.b16 %v380
        %v482 = vunpack.c.h.b16 %v380
        %v483 = vunpack.c.l.b16 %v381
        %v484 = vunpack.c.l.b16 %v382
        %v485 = vunpack.c.h.b16 %v382
        %v486 = vunpack.c.l.b16 %v383
        %v487 = vpack.c.b16 %v436, %v433
        %v488 = vpack.c.b16 %v437, %v434
        %v489 = vpack.c.b16 %v438, %v435
        %v490 = vpack.c.b16 %v442, %v439
        %v491 = vpack.c.b16 %v443, %v440
        %v492 = vpack.c.b16 %v444, %v441
        %v493 = vpack.c.b16 %v448, %v445
        %v494 = vpack.c.b16 %v449, %v446
        %v495 = vpack.c.b16 %v450, %v447
        %v496 = vpack.c.b16 %v454, %v451
        %v497 = vpack.c.b16 %v455, %v452
        %v498 = vpack.c.b16 %v456, %v453
        %v499 = vpack.c.b16 %v460, %v457
        %v500 = vpack.c.b16 %v461, %v458
        %v501 = vpack.c.b16 %v462, %v459
        %v502 = vpack.c.b16 %v466, %v463
        %v503 = vpack.c.b16 %v467, %v464
        %v504 = vpack.c.b16 %v468, %v465
        %v505 = vpack.c.b16 %v472, %v469
        %v506 = vpack.c.b16 %v473, %v470
        %v507 = vpack.c.b16 %v474, %v471
        %v508 = vpack.c.b16 %v478, %v475
        %v509 = vpack.c.b16 %v479, %v476
        %v510 = vpack.c.b16 %v480, %v477
        %v511 = vpack.c.b16 %v484, %v481
        %v512 = vpack.c.b16 %v485, %v482
        %v513 = vpack.c.b16 %v486, %v483
        %vm541 = vcmask 130048
        %v542 = vsel %vm541, %v395, 0
        %544 = vmatpush.bf16.msra.mxu0 %v508
        %545 = vmatpush.bf16.msra.mxu0 %v505
        %546 = vmatpush.bf16.msra.mxu0 %v502
        %547 = vmatpush.bf16.msra.mxu0 %v499
        %548 = vmatpush.bf16.msra.mxu0 %v496
        %549 = vmatpush.bf16.msra.mxu0 %v493
        %550 = vmatpush.bf16.msra.mxu0 %v490
        %551 = vmatpush.bf16.msra.mxu0 %v487
        %552 = vmatmul.bf16.gmra.mxu0 %v394
        %v553 = vpop.f32.mrf.mxu0
        %v554 = vadd.f32 %v386, %v553
        %v555 = vpop.f32.mrf.mxu0
        %556 = vdwg.mxu0
        %557 = vmatpush.bf16.msra.mxu0 0
        %558 = vmatpush.bf16.msra.mxu0 0
        %559 = vmatpush.bf16.msra.mxu0 0
        %560 = vmatpush.bf16.msra.mxu0 0
        %561 = vmatpush.bf16.msra.mxu0 0
        %562 = vmatpush.bf16.msra.mxu0 0
        %563 = vmatpush.bf16.msra.mxu0 0
        %564 = vmatpush.bf16.msra.mxu0 %v511
        %565 = vmatmul.bf16.gmra.mxu0 %v542
        %v566 = vpop.f32.mrf.mxu0
        %v567 = vadd.f32 %v554, %v566
        %v568 = vpop.f32.mrf.mxu0
        %569 = vdwg.mxu0
        %570 = vmatpush.bf16.msra.mxu0 %v509
        %571 = vmatpush.bf16.msra.mxu0 %v506
        %572 = vmatpush.bf16.msra.mxu0 %v503
        %573 = vmatpush.bf16.msra.mxu0 %v500
        %574 = vmatpush.bf16.msra.mxu0 %v497
        %575 = vmatpush.bf16.msra.mxu0 %v494
        %576 = vmatpush.bf16.msra.mxu0 %v491
        %577 = vmatpush.bf16.msra.mxu0 %v488
        %578 = vmatmul.bf16.gmra.mxu0 %v394
        %v579 = vpop.f32.mrf.mxu0
        %v580 = vadd.f32 %v387, %v579
        %v581 = vpop.f32.mrf.mxu0
        %582 = vdwg.mxu0
        %583 = vmatpush.bf16.msra.mxu0 0
        %584 = vmatpush.bf16.msra.mxu0 0
        %585 = vmatpush.bf16.msra.mxu0 0
        %586 = vmatpush.bf16.msra.mxu0 0
        %587 = vmatpush.bf16.msra.mxu0 0
        %588 = vmatpush.bf16.msra.mxu0 0
        %589 = vmatpush.bf16.msra.mxu0 0
        %590 = vmatpush.bf16.msra.mxu0 %v512
        %591 = vmatmul.bf16.gmra.mxu0 %v542
        %v592 = vpop.f32.mrf.mxu0
        %v593 = vadd.f32 %v580, %v592
        %v594 = vpop.f32.mrf.mxu0
        %595 = vdwg.mxu0
        %596 = vmatpush.bf16.msra.mxu0 %v510
        %597 = vmatpush.bf16.msra.mxu0 %v507
        %598 = vmatpush.bf16.msra.mxu0 %v504
        %599 = vmatpush.bf16.msra.mxu0 %v501
        %600 = vmatpush.bf16.msra.mxu0 %v498
        %601 = vmatpush.bf16.msra.mxu0 %v495
        %602 = vmatpush.bf16.msra.mxu0 %v492
        %603 = vmatpush.bf16.msra.mxu0 %v489
        %604 = vmatmul.bf16.gmra.mxu0 %v394
        %v605 = vpop.f32.mrf.mxu0
        %v606 = vadd.f32 %v388, %v605
        %v607 = vpop.f32.mrf.mxu0
        %608 = vdwg.mxu0
        %609 = vmatpush.bf16.msra.mxu0 0
        %610 = vmatpush.bf16.msra.mxu0 0
        %611 = vmatpush.bf16.msra.mxu0 0
        %612 = vmatpush.bf16.msra.mxu0 0
        %613 = vmatpush.bf16.msra.mxu0 0
        %614 = vmatpush.bf16.msra.mxu0 0
        %615 = vmatpush.bf16.msra.mxu0 0
        %616 = vmatpush.bf16.msra.mxu0 %v513
        %617 = vmatmul.bf16.gmra.mxu0 %v542
        %v618 = vpop.f32.mrf.mxu0
        %v619 = vadd.f32 %v606, %v618
        %v620 = vpop.f32.mrf.mxu0
        %621 = vdwg.mxu0
        %vm622 = vcmask 1041408
        %v623 = vsel %vm622, %v567, 0.0
        %v624 = vsel %vm622, %v593, 0.0
        %v625 = vadd.f32 %v623, %v624
        %vm626 = vcmask 353280
        %v627 = vsel %vm626, %v619, 0.0
        %v628 = vadd.f32 %v625, %v627
        %629 = vadd.xlane.f32.xlu0 %v628
        %v630 = vpop.xlane.xlu0 %629
        %v631 = vmul.f32 %v567, %v567
        %v632 = vmul.f32 %v593, %v593
        %v633 = vmul.f32 %v619, %v619
        %v634 = vsel %vm622, %v631, 0.0
        %v635 = vsel %vm622, %v632, 0.0
        %v636 = vadd.f32 %v634, %v635
        %v637 = vsel %vm626, %v633, 0.0
        %v638 = vadd.f32 %v636, %v637
        %639 = vadd.xlane.f32.xlu0 %v638
        %v640 = vpop.xlane.xlu0 %639
        %v641 = vsel %vm622, %v630, 0.0
        %v642 = vrot.slane %v641, 4
        %v643 = vadd.f32 %v641, %v642
        %v644 = vrot.slane %v643, 2
        %v645 = vadd.f32 %v643, %v644
        %v646 = vrot.slane %v645, 1
        %v647 = vadd.f32 %v645, %v646
        %v648 = vsel %vm622, %v640, 0.0
        %v649 = vrot.slane %v648, 4
        %v650 = vadd.f32 %v648, %v649
        %v651 = vrot.slane %v650, 2
        %v652 = vadd.f32 %v650, %v651
        %v653 = vrot.slane %v652, 1
        %v654 = vadd.f32 %v652, %v653
        %v655 = vrcp.pop 600.0
        %v656 = vmul.f32 600.0, %v655
        %v657 = vsub.f32 1.0, %v656
        %v658 = vmul.f32 %v655, %v657
        %v659 = vadd.f32 %v655, %v658
        %vm660 = vweird.f32 %v655
        %v661 = vsel %vm660, %v655, %v659
        %v662 = vmul.f32 %v647, %v661
        %v663 = vmul.f32 %v654, %v661
        %v664 = vmul.f32 %v662, %v662
        %v665 = vsub.f32 %v663, %v664
        %v666 = vmax.f32 %v665, 0.0
        %s667 = sld [smem:[#allocation3 + %s26]]
        %v668 = vadd.f32 %v666, 1e-05
        %v669 = vrsqrt.pop %v668
        %v670 = vmul.f32 %v669, %v668
        %v671 = vmul.f32 %v670, %v669
        %v672 = vmul.f32 0.5, %v671
        %v673 = vsub.f32 1.5, %v672
        %v674 = vmul.f32 %v669, %v673
        %vm675 = vweird.f32 %v668
        %vm676 = vweird.f32 %v669
        %vm677 = vmor %vm675, %vm676
        %v678 = vsel %vm677, %v669, %v674
        %v679 = vstv %s667
        %v680 = vmul.f32 %v679, %v678
        %s681 = sld [smem:[#allocation7 + %s26]]
        %v682 = vmul.f32 %v662, %v680
        %v683 = vstv %s681
        %v684 = vsub.f32 %v683, %v682
        %v685 = vmul.f32 %v567, %v680
        %v686 = vmul.f32 %v593, %v680
        %v687 = vmul.f32 %v619, %v680
        %v688 = vadd.f32 %v685, %v684
        %v689 = vadd.f32 %v686, %v684
        %v690 = vadd.f32 %v687, %v684
        %v691 = vpack.c.bf16 %v688, %v688
        %v692 = vpack.c.bf16 %v689, %v689
        %v693 = vpack.c.bf16 %v690, %v690
        %v694 = vld [vmem:[%s6] sm:$0xf]
        %v695 = vld [vmem:[%s6 + $0x4] sm:$0xf]
        %v696 = vld [vmem:[%s6 + $0x8] sm:$0xf]
        %v697 = vld [vmem:[%s6 + $0xc] sm:$0xf]
        %v698 = vld [vmem:[%s6 + $0x10] sm:$0xf]
        %v699 = vld [vmem:[%s6 + $0x14] sm:$0xf]
        %v700 = vld [vmem:[%s6 + $0x18] sm:$0xf]
        %v701 = vld [vmem:[%s6 + $0x1c] sm:$0xf]
        %v702 = vld [vmem:[%s6 + $0x20] sm:$0xf]
        %v703 = vld [vmem:[%s6 + $0x24] sm:$0xf]
        %v704 = vld [vmem:[%s6 + $0x28] sm:$0xf]
        %v705 = vld [vmem:[%s6 + $0x2c] sm:$0xf]
        %v706 = vld [vmem:[%s6 + $0x30] sm:$0xf]
        %v707 = vld [vmem:[%s6 + $0x34] sm:$0xf]
        %v708 = vld [vmem:[%s6 + $0x38] sm:$0xf]
        %v709 = vld [vmem:[%s6 + $0x3c] sm:$0xf]
        %v710 = vld [vmem:[%s6 + $0x40] sm:$0xf]
        %v711 = vld [vmem:[%s6 + $0x44] sm:$0xf]
        %v712 = vld [vmem:[%s6 + $0x48] sm:$0xf]
        %v713 = vld [vmem:[%s6 + $0x4c] sm:$0xf]
        %v714 = vld [vmem:[%s6 + $0x50] sm:$0xf]
        %v715 = vld [vmem:[%s6 + $0x54] sm:$0xf]
        %v716 = vld [vmem:[%s6 + $0x58] sm:$0xf]
        %v717 = vld [vmem:[%s6 + $0x5c] sm:$0xf]
        %v718 = vld [vmem:[%s6 + $0x60] sm:$0xf]
        %v719 = vld [vmem:[%s6 + $0x64] sm:$0xf]
        %v720 = vld [vmem:[%s6 + $0x68] sm:$0xf]
        %v721 = vld [vmem:[%s6 + $0x6c] sm:$0xf]
        %v722 = vld [vmem:[%s6 + $0x70] sm:$0xf]
        %v723 = vld [vmem:[%s6 + $0x74] sm:$0xf]
        %v724 = vld [vmem:[%s6 + $0x78] sm:$0xf]
        %v725 = vld [vmem:[%s6 + $0x7c] sm:$0xf]
        %v726 = vld [vmem:[%s6 + $0x80] sm:$0xf]
        %v727 = vld [vmem:[%s6 + $0x84] sm:$0xf]
        %v728 = vld [vmem:[%s6 + $0x88] sm:$0xf]
        %v729 = vld [vmem:[%s6 + $0x8c] sm:$0xf]
        %v730 = vld [vmem:[%s6 + $0x90] sm:$0xf]
        %v731 = vld [vmem:[%s6 + $0x94] sm:$0x3]
        %v732 = vld [vmem:[%s7] sm:$0x1]
        %v734 = vperm.slane %v732, 0
        %v774 = vunpack.c.l.b16 %v694
        %v775 = vunpack.c.l.b16 %v695
        %v776 = vunpack.c.l.b16 %v696
        %v777 = vunpack.c.l.b16 %v697
        %v778 = vunpack.c.l.b16 %v698
        %v779 = vunpack.c.l.b16 %v699
        %v780 = vunpack.c.l.b16 %v700
        %v781 = vunpack.c.l.b16 %v701
        %v782 = vunpack.c.l.b16 %v702
        %v783 = vunpack.c.l.b16 %v703
        %v784 = vunpack.c.l.b16 %v704
        %v785 = vunpack.c.l.b16 %v705
        %v786 = vunpack.c.l.b16 %v706
        %v787 = vunpack.c.l.b16 %v707
        %v788 = vunpack.c.l.b16 %v708
        %v789 = vunpack.c.l.b16 %v709
        %v790 = vunpack.c.l.b16 %v710
        %v791 = vunpack.c.l.b16 %v711
        %v792 = vunpack.c.l.b16 %v712
        %v793 = vunpack.c.l.b16 %v713
        %v794 = vunpack.c.l.b16 %v714
        %v795 = vunpack.c.l.b16 %v715
        %v796 = vunpack.c.l.b16 %v716
        %v797 = vunpack.c.l.b16 %v717
        %v798 = vunpack.c.l.b16 %v718
        %v799 = vunpack.c.l.b16 %v719
        %v800 = vunpack.c.l.b16 %v720
        %v801 = vunpack.c.l.b16 %v721
        %v802 = vunpack.c.l.b16 %v722
        %v803 = vunpack.c.l.b16 %v723
        %v804 = vunpack.c.l.b16 %v724
        %v805 = vunpack.c.l.b16 %v725
        %v806 = vunpack.c.l.b16 %v726
        %v807 = vunpack.c.l.b16 %v727
        %v808 = vunpack.c.l.b16 %v728
        %v809 = vunpack.c.l.b16 %v729
        %v810 = vunpack.c.l.b16 %v730
        %v811 = vunpack.c.l.b16 %v731
        %v812 = vpack.c.b16 %v775, %v774
        %v813 = vpack.c.b16 %v777, %v776
        %v814 = vpack.c.b16 %v779, %v778
        %v815 = vpack.c.b16 %v781, %v780
        %v816 = vpack.c.b16 %v783, %v782
        %v817 = vpack.c.b16 %v785, %v784
        %v818 = vpack.c.b16 %v787, %v786
        %v819 = vpack.c.b16 %v789, %v788
        %v820 = vpack.c.b16 %v791, %v790
        %v821 = vpack.c.b16 %v793, %v792
        %v822 = vpack.c.b16 %v795, %v794
        %v823 = vpack.c.b16 %v797, %v796
        %v824 = vpack.c.b16 %v799, %v798
        %v825 = vpack.c.b16 %v801, %v800
        %v826 = vpack.c.b16 %v803, %v802
        %v827 = vpack.c.b16 %v805, %v804
        %v828 = vpack.c.b16 %v807, %v806
        %v829 = vpack.c.b16 %v809, %v808
        %v830 = vpack.c.b16 %v811, %v810
        %vm849 = vcmask 359424
        %v851 = vsel %vm849, %v693, 0
        %vm853 = vcmask 1045504
        %v855 = vsel %vm853, %v830, 0
        %857 = vmatpush.bf16.msra.mxu0 %v819
        %858 = vmatpush.bf16.msra.mxu0 %v818
        %859 = vmatpush.bf16.msra.mxu0 %v817
        %860 = vmatpush.bf16.msra.mxu0 %v816
        %861 = vmatpush.bf16.msra.mxu0 %v815
        %862 = vmatpush.bf16.msra.mxu0 %v814
        %863 = vmatpush.bf16.msra.mxu0 %v813
        %864 = vmatpush.bf16.msra.mxu0 %v812
        %865 = vmatmul.bf16.gmra.mxu0 %v691
        %v866 = vpop.f32.mrf.mxu0
        %v867 = vadd.f32 %v734, %v866
        %v868 = vpop.f32.mrf.mxu0
        %869 = vdwg.mxu0
        %870 = vmatpush.bf16.msra.mxu0 %v827
        %871 = vmatpush.bf16.msra.mxu0 %v826
        %872 = vmatpush.bf16.msra.mxu0 %v825
        %873 = vmatpush.bf16.msra.mxu0 %v824
        %874 = vmatpush.bf16.msra.mxu0 %v823
        %875 = vmatpush.bf16.msra.mxu0 %v822
        %876 = vmatpush.bf16.msra.mxu0 %v821
        %877 = vmatpush.bf16.msra.mxu0 %v820
        %878 = vmatmul.bf16.gmra.mxu0 %v692
        %v879 = vpop.f32.mrf.mxu0
        %v880 = vadd.f32 %v867, %v879
        %v881 = vpop.f32.mrf.mxu0
        %882 = vdwg.mxu0
        %883 = vmatpush.bf16.msra.mxu0 0
        %884 = vmatpush.bf16.msra.mxu0 0
        %885 = vmatpush.bf16.msra.mxu0 0
        %886 = vmatpush.bf16.msra.mxu0 0
        %887 = vmatpush.bf16.msra.mxu0 0
        %888 = vmatpush.bf16.msra.mxu0 %v855
        %889 = vmatpush.bf16.msra.mxu0 %v829
        %890 = vmatpush.bf16.msra.mxu0 %v828
        %891 = vmatmul.bf16.gmra.mxu0 %v851
        %v892 = vpop.f32.mrf.mxu0
        %v893 = vadd.f32 %v880, %v892
        %v894 = vpop.f32.mrf.mxu0
        %895 = vdwg.mxu0
        %s896 = sld [smem:[#allocation2]]
        %v897 = vstv %s896
        %v898 = vrcp.pop %v897
        %v899 = vmul.f32 %v897, %v898
        %v900 = vsub.f32 1.0, %v899
        %v901 = vmul.f32 %v898, %v900
        %v902 = vadd.f32 %v898, %v901
        %vm903 = vweird.f32 %v897
        %vm904 = vweird.f32 %v898
        %vm905 = vmor %vm903, %vm904
        %v906 = vsel %vm905, %v898, %v902
        %v907 = vand.u32 2147483647, %v897
        %vm908 = vcmp.eq.f32.partialorder %v907, 8.507059e+37
        %v909 = vand.u32 %v897, 2147483648
        %v910 = vor.u32 1.1754944e-38, %v909
        %v911 = vsel %vm908, %v910, %v906
        %s912 = vtos %v911
        %v913 = vstv %s912
        %v914 = vmul.f32 %v893, %v913
        %916 = vrot.lane.b32.xlu0 %v914, 119
        %v917 = vpop.permute.xlu0 %916
        %v919 = vmax.f32 %v914, %v917
        %v920 = vsub.f32 %v914, %v919
        %v921 = vmul.f32 %v920, 1.442695
        %v922 = vpow.pop %v921
        %924 = vrot.lane.b32.xlu0 %v919, 9
        %v925 = vpop.permute.xlu0 %924
        %v927 = vsub.f32 %v914, %v925
        %v928 = vmul.f32 %v927, 1.442695
        %v929 = vpow.pop %v928
        %931 = vrot.lane.b32.xlu0 %v929, 119
        %v932 = vpop.permute.xlu0 %931
        %v934 = vadd.f32 %v922, %v932
        %v935 = vrcp.pop %v934
        %v936 = vmul.f32 %v922, %v935
        %vm937 = vcmask 66560
        %938 = vst.msk [vmem:[%s341] sm:$0x3] %vm937, %v936
        %940 = vrot.lane.b32.xlu0 %v935, 9
        %v941 = vpop.permute.xlu0 %940
        %v943 = vmul.f32 %v929, %v941
        %vm944 = vcmask 140360
        %945 = vst.msk [vmem:[%s341] sm:$0x3] %vm944, %v943
        %s946 = sand.u32 %s207, 1
        %s947 = scalar_lea.sflag [#allocation5], %s946
        %s948 = sand.u32 %s207, 1
        %s949 = smul.addr %s948, 2
        %s950 = scalar_lea.vmem [#allocation10], %s949
        // Predicated region
        $region65: #{tpu_custom_call.1} parent=51 // pred_check
          %p951 = pneg %p217
        $region66: #{tpu_custom_call.1} parent=51 // pred_check_branch
          %953 = sbr.rel (%p951) target = $region68
        $region67: #{tpu_custom_call.1} parent=51 // pred_region
          %955 = vsyncadd %s947, 0
          %s956 = smul.addr %s26, 2
          %s957 = scalar_lea.hbm %s8, %s956
          %s959 = sshll.u32 %s950, 4
          %s960 = int_to_ptr.vmem [resolvable:$true] %s959
          %s961 = sshll.u32 %s957, 4
          %s962 = int_to_ptr.hbm [resolvable:$true] %s961
          %964 = dma.vmem_to_hbm [thread:$0]  %s960, 32, %s962, %s947
        $region68: #{tpu_custom_call.1} parent=51 // pred_fallthru
          _
      $region52: #{tpu_custom_call.1} parent=5 // pred_fallthru
        _
      %p965 = scmp.le.s32.totalorder 2, %s21
      // Predicated region
      $region69: #{tpu_custom_call.1} parent=5 // pred_check
        %p966 = pneg %p965
      $region70: #{tpu_custom_call.1} parent=5 // pred_check_branch
        %968 = sbr.rel (%p966) target = $region72
      $region71: #{tpu_custom_call.1} parent=5 // pred_region
        %s969 = ssub.s32 %s21, 2
        // Predicated region
        $region73: #{tpu_custom_call.1} parent=71 // pred_check
          %p970 = pneg %p223
        $region74: #{tpu_custom_call.1} parent=71 // pred_check_branch
          %972 = sbr.rel (%p970) target = $region76
        $region75: #{tpu_custom_call.1} parent=71 // pred_region
          %s973 = sand.u32 %s208, 1
          %s974 = scalar_lea.sflag [#allocation5], %s973
          %s975 = sand.u32 %s208, 1
          %s976 = smul.addr %s975, 2
          %s977 = scalar_lea.vmem [#allocation10], %s976
          %979 = dma.done %s974, 32
        $region76: #{tpu_custom_call.1} parent=71 // pred_fallthru
          _
      $region72: #{tpu_custom_call.1} parent=5 // pred_fallthru
        _
    $region6: #{tpu_custom_call.1} parent=1 // loop_footer
      %s25 = sadd.s32 1, %s21
    $region7: #{tpu_custom_call.1} parent=1 // loop_footer_branch
      %20 = sbr.rel target = $region3
    $region8: #{tpu_custom_call.1} parent=1 // loop_exit
      _
    %980 = vsyncpa [#allocation4], 1
    %s981 = scalar_lea.sflag [#allocation4], 1
    %982 = vsyncpa %s981, 1
    %983 = vsyncpa [#allocation5], 1
    %s984 = scalar_lea.sflag [#allocation5], 1
    %985 = vsyncpa %s984, 1
    %986 = vsyncpa [#allocation6], 1
    %s987 = scalar_lea.sflag [#allocation6], 1
    %988 = vsyncpa %s987, 1
    %989 = vsyncpa [#allocation8], 1

</llo_original>
